<compile_context>
chip_gen: v7x
topology: tpu7x:2x2x1
jax: 0.10.0
libtpu: 0.0.40
codegen_flags: <defaults>
</compile_context>

<pallas_src>
import functools
import math

import jax
import jax.numpy as jnp
from jax import lax
from jax.experimental import pallas as pl
from jax.experimental.pallas import tpu as pltpu


# ----------------------------------------------------------------------------
# Kernel 1: fused keypoint encoder (whole MLP chain + descriptor residual add)
# ----------------------------------------------------------------------------

def _kenc_kernel(*refs, n_layers, relu_flags):
    inp_ref, desc_ref = refs[0], refs[1]
    w_refs = refs[2:2 + 2 * n_layers]
    o_ref = refs[2 + 2 * n_layers]

    y = inp_ref[0].astype(jnp.float32)                        # (N, Cin_pad)
    for i in range(n_layers):
        w = w_refs[2 * i][...]                                # bf16 (Cin, Cout)
        b = w_refs[2 * i + 1][...].astype(jnp.float32)        # (1, Cout)
        y = jnp.dot(y.astype(w.dtype), w,
                    preferred_element_type=jnp.float32) + b
        if relu_flags[i]:
            y = jnp.maximum(y, 0.0)
    o_ref[0] = (desc_ref[0].astype(jnp.float32) + y).astype(o_ref.dtype)


def keypoint_encoder(inp, desc, layers, relu_flags):
    """inp: (B, N, Cin_pad), desc: (B, N, D) -> desc + MLP(inp), all in one call."""
    B, N, Cin = inp.shape
    D = desc.shape[-1]
    flat_w = []
    in_specs = [
        pl.BlockSpec((1, N, Cin), lambda i: (i, 0, 0)),
        pl.BlockSpec((1, N, D), lambda i: (i, 0, 0)),
    ]
    for p in layers:
        flat_w += [p['w'], p['b']]
        in_specs += [
            pl.BlockSpec(p['w'].shape, lambda i: (0, 0)),
            pl.BlockSpec(p['b'].shape, lambda i: (0, 0)),
        ]
    return pl.pallas_call(
        functools.partial(_kenc_kernel, n_layers=len(layers),
                          relu_flags=tuple(relu_flags)),
        out_shape=jax.ShapeDtypeStruct((B, N, D), jnp.float32),
        grid=(B,),
        in_specs=in_specs,
        out_specs=pl.BlockSpec((1, N, D), lambda i: (i, 0, 0)),
        compiler_params=pltpu.CompilerParams(dimension_semantics=("parallel",)),
    )(inp, desc, *flat_w)


# ----------------------------------------------------------------------------
# Kernel 2: fused GNN attentional propagation layer (one direction, grid over B)
#   QKV proj -> multi-head attention -> merge -> MLP([2D,2D,D]) -> residual add
# ----------------------------------------------------------------------------

def _gnn_kernel(x_ref, src_ref,
                wq_ref, bq_ref, wkv_ref, bkv_ref,
                wm_ref, bm_ref,
                w1x_ref, w1m_ref, b1_ref,
                w2_ref, b2_ref,
                o_ref, msg_scratch, *, num_heads, scale):
    f32 = jnp.float32
    bf = wq_ref.dtype
    x = x_ref[0].astype(f32)                                   # (Nq, D)
    src = src_ref[0].astype(f32)                               # (Ns, D)
    D = x.shape[-1]
    dh = D // num_heads

    # Fused projections (q from x, k|v fused from src). Weight columns are already
    # permuted so each head occupies a contiguous [h*dh:(h+1)*dh] slice.
    q = jnp.dot(x.astype(bf), wq_ref[...],
                preferred_element_type=f32) + bq_ref[...].astype(f32)      # (Nq, D)
    kv = jnp.dot(src.astype(bf), wkv_ref[...],
                 preferred_element_type=f32) + bkv_ref[...].astype(f32)    # (Ns, 2D)
    k = kv[:, :D]
    v = kv[:, D:]

    for h in range(num_heads):
        sl = slice(h * dh, (h + 1) * dh)
        qh, kh, vh = q[:, sl], k[:, sl], v[:, sl]
        s = lax.dot_general(qh.astype(bf), kh.astype(bf),
                            (((1,), (1,)), ((), ())),
                            preferred_element_type=f32) * scale            # (Nq, Ns)
        s = s - jnp.max(s, axis=-1, keepdims=True)
        e = jnp.exp(s)
        p = e * pl.reciprocal(jnp.sum(e, axis=-1, keepdims=True), approx=True)
        msg_scratch[:, sl] = jnp.dot(p.astype(bf), vh.astype(bf),
                                     preferred_element_type=f32)

    msg = msg_scratch[...]                                                 # (Nq, D)
    msg = jnp.dot(msg.astype(bf), wm_ref[...],
                  preferred_element_type=f32) + bm_ref[...].astype(f32)

    # MLP([2D, 2D, D]) applied to cat([x, msg]) without materializing the concat.
    h1 = (jnp.dot(x.astype(bf), w1x_ref[...], preferred_element_type=f32)
          + jnp.dot(msg.astype(bf), w1m_ref[...], preferred_element_type=f32)
          + b1_ref[...].astype(f32))
    h1 = jnp.maximum(h1, 0.0)
    delta = jnp.dot(h1.astype(bf), w2_ref[...],
                    preferred_element_type=f32) + b2_ref[...].astype(f32)

    o_ref[0] = (x + delta).astype(o_ref.dtype)


def gnn_layer(x, src, lp, num_heads):
    """x: (B, Nq, D), src: (B, Ns, D) -> x + AttentionalPropagation(x, src)."""
    B, Nq, D = x.shape
    Ns = src.shape[1]
    scale = 1.0 / math.sqrt(D // num_heads)
    ws = [lp['wq'], lp['bq'], lp['wkv'], lp['bkv'],
          lp['wm'], lp['bm'],
          lp['w1x'], lp['w1m'], lp['b1'],
          lp['w2'], lp['b2']]
    in_specs = ([pl.BlockSpec((1, Nq, D), lambda i: (i, 0, 0)),
                 pl.BlockSpec((1, Ns, D), lambda i: (i, 0, 0))]
                + [pl.BlockSpec(w.shape, lambda i: (0, 0)) for w in ws])
    return pl.pallas_call(
        functools.partial(_gnn_kernel, num_heads=num_heads, scale=scale),
        out_shape=jax.ShapeDtypeStruct((B, Nq, D), jnp.float32),
        grid=(B,),
        in_specs=in_specs,
        out_specs=pl.BlockSpec((1, Nq, D), lambda i: (i, 0, 0)),
        scratch_shapes=[pltpu.VMEM((Nq, D), jnp.float32)],
        compiler_params=pltpu.CompilerParams(dimension_semantics=("parallel",)),
    )(x, src, *ws)


# ----------------------------------------------------------------------------
# Kernel 3: fused final projection + score matrix + dustbins + log-Sinkhorn
# ----------------------------------------------------------------------------

def _score_ot_kernel(d0_ref, d1_ref, wfp_ref, bfp_ref, bin_ref, o_ref,
                     z_scratch, *, iters, m, n, inv_sqrt_d):
    f32 = jnp.float32
    bf = wfp_ref.dtype
    wfp = wfp_ref[...]
    bfp = bfp_ref[...].astype(f32)

    m0 = jnp.dot(d0_ref[0].astype(bf), wfp, preferred_element_type=f32) + bfp  # (m, D)
    m1 = jnp.dot(d1_ref[0].astype(bf), wfp, preferred_element_type=f32) + bfp  # (n, D)
    scores = lax.dot_general(m0.astype(bf), m1.astype(bf),
                             (((1,), (1,)), ((), ())),
                             preferred_element_type=f32) * inv_sqrt_d          # (m, n)

    # Build couplings (scores bordered by the learned dustbin score) in VMEM.
    z_scratch[...] = jnp.broadcast_to(bin_ref[...].astype(f32), (m + 1, n + 1))
    z_scratch[:m, :n] = scores
    Z = z_scratch[...]

    norm = -math.log(m + n)
    row_idx = lax.broadcasted_iota(jnp.int32, (m + 1, 1), 0)
    col_idx = lax.broadcasted_iota(jnp.int32, (1, n + 1), 1)
    log_mu = jnp.where(row_idx < m, norm, math.log(n) + norm).astype(f32)
    log_nu = jnp.where(col_idx < n, norm, math.log(m) + norm).astype(f32)

    def lse(x, axis):
        mx = jnp.max(x, axis=axis, keepdims=True)
        return mx + jnp.log(jnp.sum(jnp.exp(x - mx), axis=axis, keepdims=True))

    def body(_, carry):
        u, v = carry
        u = log_mu - lse(Z + v, axis=1)   # (m+1, 1)
        v = log_nu - lse(Z + u, axis=0)   # (1, n+1)
        return (u, v)

    u0 = jnp.zeros((m + 1, 1), f32)
    v0 = jnp.zeros((1, n + 1), f32)
    u, v = lax.fori_loop(0, iters, body, (u0, v0))
    o_ref[0] = (Z + u + v - norm).astype(o_ref.dtype)


def score_and_transport(d0, d1, wfp, bfp, bin_score, iters):
    """Fused final_proj + einsum/sqrt(D) + dustbins + log-space Sinkhorn."""
    B, N0, D = d0.shape
    N1 = d1.shape[1]
    return pl.pallas_call(
        functools.partial(_score_ot_kernel, iters=iters, m=N0, n=N1,
                          inv_sqrt_d=1.0 / math.sqrt(D)),
        out_shape=jax.ShapeDtypeStruct((B, N0 + 1, N1 + 1), jnp.float32),
        grid=(B,),
        in_specs=[
            pl.BlockSpec((1, N0, D), lambda i: (i, 0, 0)),
            pl.BlockSpec((1, N1, D), lambda i: (i, 0, 0)),
            pl.BlockSpec(wfp.shape, lambda i: (0, 0)),
            pl.BlockSpec(bfp.shape, lambda i: (0, 0)),
            pl.BlockSpec((1, 1), lambda i: (0, 0)),
        ],
        out_specs=pl.BlockSpec((1, N0 + 1, N1 + 1), lambda i: (i, 0, 0)),
        scratch_shapes=[pltpu.VMEM((N0 + 1, N1 + 1), jnp.float32)],
        compiler_params=pltpu.CompilerParams(dimension_semantics=("parallel",)),
    )(d0, d1, wfp, bfp, bin_score)


# ----------------------------------------------------------------------------
# Glue: parameter setup (torch-equivalent init + kernel-friendly repacking)
# ----------------------------------------------------------------------------

def normalize_keypoints(kpts, image_shape):
    _, _, height, width = image_shape
    size = jnp.array([[float(width), float(height)]], jnp.float32)      # (1, 2)
    center = size / 2.0
    scaling = jnp.max(size, axis=1, keepdims=True) * 0.7                # (1, 1)
    return (kpts - center[:, None, :]) / scaling[:, None, :]


def init_params(key, cfg):
    D = cfg['descriptor_dim']
    H = cfg['num_heads']
    dh = D // H
    ke_channels = [3] + list(cfg['keypoint_encoder']) + [D]
    keys = iter(jax.random.split(key, 256))

    def conv(c_in, c_out, zero_bias=False):
        kw, kb = jax.random.split(next(keys))
        bound = 1.0 / math.sqrt(c_in)
        w = jax.random.uniform(kw, (c_in, c_out), jnp.float32, -bound, bound)
        b = (jnp.zeros((1, c_out), jnp.float32) if zero_bias else
             jax.random.uniform(kb, (1, c_out), jnp.float32, -bound, bound))
        return w, b

    def fold_bn(w, b, eps=1e-5):
        # eval-mode BatchNorm1d with default stats: y = x / sqrt(1 + eps)
        s = 1.0 / math.sqrt(1.0 + eps)
        return w * s, b * s

    bf16 = lambda w: w.astype(jnp.bfloat16)

    # Keypoint encoder MLP([3] + layers + [D]); last layer zero-bias, no BN/ReLU.
    kenc, kenc_relu = [], []
    nc = len(ke_channels)
    for i in range(1, nc):
        last = (i == nc - 1)
        w, b = conv(ke_channels[i - 1], ke_channels[i], zero_bias=last)
        if not last:
            w, b = fold_bn(w, b)
        if i == 1:
            # Pad the 3-channel input of the first layer to 8 (zero rows; same math).
            w = jnp.pad(w, ((0, 8 - 3), (0, 0)))
        kenc.append({'w': bf16(w), 'b': b})
        kenc_relu.append(not last)

    # Head-contiguous channel permutation (semantics preserving):
    # torch channel c = d_i*H + h  ->  kernel channel j = h*dh + d_i
    perm = (jnp.arange(D) % dh) * H + (jnp.arange(D) // dh)

    gnn = []
    for _ in cfg['gnn_layers']:
        wq, bq = conv(D, D)
        wk, bk = conv(D, D)
        wv, bv = conv(D, D)
        wm, bm = conv(D, D)
        w1, b1 = conv(2 * D, 2 * D)
        w1, b1 = fold_bn(w1, b1)
        w2, b2 = conv(2 * D, D, zero_bias=True)
        gnn.append({
            'wq': bf16(wq[:, perm]), 'bq': bq[:, perm],
            'wkv': bf16(jnp.concatenate([wk[:, perm], wv[:, perm]], axis=1)),
            'bkv': jnp.concatenate([bk[:, perm], bv[:, perm]], axis=1),
            'wm': bf16(wm[perm, :]), 'bm': bm,
            'w1x': bf16(w1[:D]), 'w1m': bf16(w1[D:]), 'b1': b1,
            'w2': bf16(w2), 'b2': b2,
        })

    wfp, bfp = conv(D, D)
    return {
        'kenc': kenc, 'kenc_relu': kenc_relu, 'gnn': gnn,
        'wfp': bf16(wfp), 'bfp': bfp,
        'bin_score': jnp.full((1, 1), 1.0, jnp.float32),
    }


# ----------------------------------------------------------------------------
# Forward
# ----------------------------------------------------------------------------

def matching_forward(params, data, cfg):
    H = cfg['num_heads']

    kpts0, kpts1 = data['keypoints0'], data['keypoints1']
    sc0, sc1 = data['scores0'], data['scores1']
    # layout: transpose PyTorch (B, D, N) descriptors to kernel layout (B, N, D).
    d0 = jnp.transpose(data['descriptors0'], (0, 2, 1)).astype(jnp.float32)
    d1 = jnp.transpose(data['descriptors1'], (0, 2, 1)).astype(jnp.float32)
    B, N0, _ = kpts0.shape
    N1 = kpts1.shape[1]

    k0n = normalize_keypoints(kpts0, data['image0'].shape)
    k1n = normalize_keypoints(kpts1, data['image1'].shape)

    def kenc_input(kn, sc):
        x = jnp.concatenate([kn, sc[..., None]], axis=-1)       # (B, N, 3)
        return jnp.pad(x, ((0, 0), (0, 0), (0, 8 - 3)))         # pad channels 3 -> 8

    d0 = keypoint_encoder(kenc_input(k0n, sc0), d0, params['kenc'], params['kenc_relu'])
    d1 = keypoint_encoder(kenc_input(k1n, sc1), d1, params['kenc'], params['kenc_relu'])

    for lp, name in zip(params['gnn'], cfg['gnn_layers']):
        if name == 'cross':
            s0, s1 = d1, d0
        else:
            s0, s1 = d0, d1
        d0, d1 = gnn_layer(d0, s0, lp, H), gnn_layer(d1, s1, lp, H)

    Z = score_and_transport(d0, d1, params['wfp'], params['bfp'],
                            params['bin_score'], cfg['sinkhorn_iterations'])

    # Match extraction (tiny argmax/gather glue, plain JAX).
    inner = Z[:, :-1, :-1]
    max0 = jnp.max(inner, axis=2)
    indices0 = jnp.argmax(inner, axis=2)
    max1 = jnp.max(inner, axis=1)
    indices1 = jnp.argmax(inner, axis=1)
    ar0 = jnp.arange(N0)[None, :]
    ar1 = jnp.arange(N1)[None, :]
    mutual0 = ar0 == jnp.take_along_axis(indices1, indices0, axis=1)
    mutual1 = ar1 == jnp.take_along_axis(indices0, indices1, axis=1)
    mscores0 = jnp.where(mutual0, jnp.exp(max0), 0.0)
    mscores1 = jnp.where(mutual1, jnp.take_along_axis(mscores0, indices1, axis=1), 0.0)
    valid0 = mutual0 & (mscores0 > cfg['match_threshold'])
    valid1 = mutual1 & jnp.take_along_axis(valid0, indices1, axis=1)
    matches0 = jnp.where(valid0, indices0, -1)
    matches1 = jnp.where(valid1, indices1, -1)

    return {
        'matches0': matches0,
        'matches1': matches1,
        'matching_scores0': mscores0,
        'matching_scores1': mscores1,
    }


if __name__ == "__main__":
    cfg = dict(
        descriptor_dim=32,
        keypoint_encoder=[16, 32],
        gnn_layers=('self', 'cross'),
        num_heads=4,
        sinkhorn_iterations=10,
        match_threshold=0.2,
    )

    key = jax.random.PRNGKey(0)
    (k_img0, k_img1, k_kp0, k_kp1,
     k_sc0, k_sc1, k_d0, k_d1, k_par) = jax.random.split(key, 9)

    B, N, D = 2, 8, cfg['descriptor_dim']
    Hi = Wi = 16

    d0 = jax.random.normal(k_d0, (B, D, N), jnp.float32)
    d1 = jax.random.normal(k_d1, (B, D, N), jnp.float32)

    data = {
        'image0': jax.random.normal(k_img0, (B, 1, Hi, Wi), jnp.float32),
        'image1': jax.random.normal(k_img1, (B, 1, Hi, Wi), jnp.float32),
        'keypoints0': jax.random.uniform(k_kp0, (B, N, 2), jnp.float32, 0.0, Wi - 1.0),
        'keypoints1': jax.random.uniform(k_kp1, (B, N, 2), jnp.float32, 0.0, Wi - 1.0),
        'scores0': jax.random.uniform(k_sc0, (B, N), jnp.float32),
        'scores1': jax.random.uniform(k_sc1, (B, N), jnp.float32),
        'descriptors0': d0 / jnp.linalg.norm(d0, axis=1, keepdims=True),
        'descriptors1': d1 / jnp.linalg.norm(d1, axis=1, keepdims=True),
    }

    params = init_params(k_par, cfg)
    pred = matching_forward(params, data, cfg)
    jax.block_until_ready(pred)
    print("KERNEL_OK")
</pallas_src>

<mosaic_0001>
module attributes {stable_mosaic.version = 11 : i64} {
  func.func @_kenc_kernel(%arg0: i32, %arg1: memref<1x8x8xf32, #tpu.memory_space<vmem>>, %arg2: memref<1x8x32xf32, #tpu.memory_space<vmem>>, %arg3: memref<8x16xbf16, #tpu.memory_space<vmem>>, %arg4: memref<1x16xf32, #tpu.memory_space<vmem>>, %arg5: memref<16x32xbf16, #tpu.memory_space<vmem>>, %arg6: memref<1x32xf32, #tpu.memory_space<vmem>>, %arg7: memref<32x32xbf16, #tpu.memory_space<vmem>>, %arg8: memref<1x32xf32, #tpu.memory_space<vmem>>, %arg9: memref<1x8x32xf32, #tpu.memory_space<vmem>>) attributes {dimension_semantics = [#tpu.dimension_semantics<parallel>], iteration_bounds = array<i64: 2>, scalar_prefetch = 0 : i64, scratch_operands = 0 : i64, tpu.core_type = #tpu.core_type<tc>, window_params = [{transform_indices = @transform_0, window_bounds = array<i64: 1, 8, 8>}, {transform_indices = @transform_1, window_bounds = array<i64: 1, 8, 32>}, {pipeline_mode = #tpu.pipeline_mode<synchronous>, transform_indices = @transform_2, window_bounds = array<i64: 8, 16>}, {pipeline_mode = #tpu.pipeline_mode<synchronous>, transform_indices = @transform_3, window_bounds = array<i64: 1, 16>}, {pipeline_mode = #tpu.pipeline_mode<synchronous>, transform_indices = @transform_4, window_bounds = array<i64: 16, 32>}, {pipeline_mode = #tpu.pipeline_mode<synchronous>, transform_indices = @transform_5, window_bounds = array<i64: 1, 32>}, {pipeline_mode = #tpu.pipeline_mode<synchronous>, transform_indices = @transform_6, window_bounds = array<i64: 32, 32>}, {pipeline_mode = #tpu.pipeline_mode<synchronous>, transform_indices = @transform_7, window_bounds = array<i64: 1, 32>}, {transform_indices = @transform_8, window_bounds = array<i64: 1, 8, 32>}]} {
    %c0 = arith.constant 0 : index
    %c0_0 = arith.constant 0 : index
    %c0_1 = arith.constant 0 : index
    %0 = vector.load %arg1[%c0, %c0_0, %c0_1] : memref<1x8x8xf32, #tpu.memory_space<vmem>>, vector<1x8x8xf32>
    %1 = vector.shape_cast %0 : vector<1x8x8xf32> to vector<8x8xf32>
    %c0_2 = arith.constant 0 : index
    %c0_3 = arith.constant 0 : index
    %2 = vector.load %arg3[%c0_2, %c0_3] : memref<8x16xbf16, #tpu.memory_space<vmem>>, vector<8x16xbf16>
    %c0_4 = arith.constant 0 : index
    %c0_5 = arith.constant 0 : index
    %3 = vector.load %arg4[%c0_4, %c0_5] : memref<1x16xf32, #tpu.memory_space<vmem>>, vector<1x16xf32>
    %4 = arith.truncf %1 : vector<8x8xf32> to vector<8x8xbf16>
    %cst = arith.constant dense<0.000000e+00> : vector<8x16xf32>
    %5 = tpu.matmul %4, %2, %cst {dimension_numbers = #tpu.dot_dimension_numbers<[1], [0], [0], [1], [0, 0, 1, 1], [], []>} : vector<8x8xbf16>, vector<8x16xbf16>, vector<8x16xf32> -> vector<8x16xf32>
    %6 = vector.broadcast %3 : vector<1x16xf32> to vector<8x16xf32>
    %7 = arith.addf %5, %6 : vector<8x16xf32>
    %cst_6 = arith.constant 0.000000e+00 : f32
    %8 = vector.broadcast %cst_6 : f32 to vector<8x16xf32>
    %9 = arith.maximumf %7, %8 : vector<8x16xf32>
    %c0_7 = arith.constant 0 : index
    %c0_8 = arith.constant 0 : index
    %10 = vector.load %arg5[%c0_7, %c0_8] : memref<16x32xbf16, #tpu.memory_space<vmem>>, vector<16x32xbf16>
    %c0_9 = arith.constant 0 : index
    %c0_10 = arith.constant 0 : index
    %11 = vector.load %arg6[%c0_9, %c0_10] : memref<1x32xf32, #tpu.memory_space<vmem>>, vector<1x32xf32>
    %12 = arith.truncf %9 : vector<8x16xf32> to vector<8x16xbf16>
    %cst_11 = arith.constant dense<0.000000e+00> : vector<8x32xf32>
    %13 = tpu.matmul %12, %10, %cst_11 {dimension_numbers = #tpu.dot_dimension_numbers<[1], [0], [0], [1], [0, 0, 1, 1], [], []>} : vector<8x16xbf16>, vector<16x32xbf16>, vector<8x32xf32> -> vector<8x32xf32>
    %14 = vector.broadcast %11 : vector<1x32xf32> to vector<8x32xf32>
    %15 = arith.addf %13, %14 : vector<8x32xf32>
    %cst_12 = arith.constant 0.000000e+00 : f32
    %16 = vector.broadcast %cst_12 : f32 to vector<8x32xf32>
    %17 = arith.maximumf %15, %16 : vector<8x32xf32>
    %c0_13 = arith.constant 0 : index
    %c0_14 = arith.constant 0 : index
    %18 = vector.load %arg7[%c0_13, %c0_14] : memref<32x32xbf16, #tpu.memory_space<vmem>>, vector<32x32xbf16>
    %c0_15 = arith.constant 0 : index
    %c0_16 = arith.constant 0 : index
    %19 = vector.load %arg8[%c0_15, %c0_16] : memref<1x32xf32, #tpu.memory_space<vmem>>, vector<1x32xf32>
    %20 = arith.truncf %17 : vector<8x32xf32> to vector<8x32xbf16>
    %cst_17 = arith.constant dense<0.000000e+00> : vector<8x32xf32>
    %21 = tpu.matmul %20, %18, %cst_17 {dimension_numbers = #tpu.dot_dimension_numbers<[1], [0], [0], [1], [0, 0, 1, 1], [], []>} : vector<8x32xbf16>, vector<32x32xbf16>, vector<8x32xf32> -> vector<8x32xf32>
    %22 = vector.broadcast %19 : vector<1x32xf32> to vector<8x32xf32>
    %23 = arith.addf %21, %22 : vector<8x32xf32>
    %c0_18 = arith.constant 0 : index
    %c0_19 = arith.constant 0 : index
    %c0_20 = arith.constant 0 : index
    %24 = vector.load %arg2[%c0_18, %c0_19, %c0_20] : memref<1x8x32xf32, #tpu.memory_space<vmem>>, vector<1x8x32xf32>
    %25 = vector.shape_cast %24 : vector<1x8x32xf32> to vector<8x32xf32>
    %26 = arith.addf %25, %23 : vector<8x32xf32>
    %c0_21 = arith.constant 0 : index
    %c0_22 = arith.constant 0 : index
    %c0_23 = arith.constant 0 : index
    %27 = vector.load %arg9[%c0_21, %c0_22, %c0_23] : memref<1x8x32xf32, #tpu.memory_space<vmem>>, vector<1x8x32xf32>
    %28 = vector.shape_cast %27 : vector<1x8x32xf32> to vector<8x32xf32>
    %29 = vector.shape_cast %26 : vector<8x32xf32> to vector<1x8x32xf32>
    tpu.vector_store %arg9[%c0_21, %c0_22, %c0_23], %29 {strides = array<i32>} : memref<1x8x32xf32, #tpu.memory_space<vmem>>, vector<1x8x32xf32>,
    return
  }
  func.func @transform_0(%arg0: i32) -> (i32, i32, i32) {
    %c0_i32 = arith.constant 0 : i32
    %c0_i32_0 = arith.constant 0 : i32
    %c0_i32_1 = arith.constant 0 : i32
    return %arg0, %c0_i32, %c0_i32_0 : i32, i32, i32
  }
  func.func @transform_1(%arg0: i32) -> (i32, i32, i32) {
    %c0_i32 = arith.constant 0 : i32
    %c0_i32_0 = arith.constant 0 : i32
    %c0_i32_1 = arith.constant 0 : i32
    return %arg0, %c0_i32, %c0_i32_0 : i32, i32, i32
  }
  func.func @transform_2(%arg0: i32) -> (i32, i32) {
    %c0_i32 = arith.constant 0 : i32
    %c0_i32_0 = arith.constant 0 : i32
    %c0_i32_1 = arith.constant 0 : i32
    return %c0_i32, %c0_i32_0 : i32, i32
  }
  func.func @transform_3(%arg0: i32) -> (i32, i32) {
    %c0_i32 = arith.constant 0 : i32
    %c0_i32_0 = arith.constant 0 : i32
    %c0_i32_1 = arith.constant 0 : i32
    return %c0_i32, %c0_i32_0 : i32, i32
  }
  func.func @transform_4(%arg0: i32) -> (i32, i32) {
    %c0_i32 = arith.constant 0 : i32
    %c0_i32_0 = arith.constant 0 : i32
    %c0_i32_1 = arith.constant 0 : i32
    return %c0_i32, %c0_i32_0 : i32, i32
  }
  func.func @transform_5(%arg0: i32) -> (i32, i32) {
    %c0_i32 = arith.constant 0 : i32
    %c0_i32_0 = arith.constant 0 : i32
    %c0_i32_1 = arith.constant 0 : i32
    return %c0_i32, %c0_i32_0 : i32, i32
  }
  func.func @transform_6(%arg0: i32) -> (i32, i32) {
    %c0_i32 = arith.constant 0 : i32
    %c0_i32_0 = arith.constant 0 : i32
    %c0_i32_1 = arith.constant 0 : i32
    return %c0_i32, %c0_i32_0 : i32, i32
  }
  func.func @transform_7(%arg0: i32) -> (i32, i32) {
    %c0_i32 = arith.constant 0 : i32
    %c0_i32_0 = arith.constant 0 : i32
    %c0_i32_1 = arith.constant 0 : i32
    return %c0_i32, %c0_i32_0 : i32, i32
  }
  func.func @transform_8(%arg0: i32) -> (i32, i32, i32) {
    %c0_i32 = arith.constant 0 : i32
    %c0_i32_0 = arith.constant 0 : i32
    %c0_i32_1 = arith.constant 0 : i32
    return %arg0, %c0_i32, %c0_i32_0 : i32, i32, i32
  }
}

</mosaic_0001>

<llo_original>
// kernel: tpu_custom_call.1
$region0: #{tpu_custom_call.1}
  #allocation0 [shape = 'u32[]', space=smem, size = 0x4, offset = 0x4, fixed_abs, tag = 'smem constant byte address 0x4 - core index']
  #allocation1 [shape = 'u32[144,128]{1,0:T(1,128)}', space=vmem, size = 0x12000, scoped, tag = 'internal scratch']
  %s0 = inlined_call_operand.hbm [shape: f32[2,8,8], index: 0, kind: input, shape index: {}]
  %s1 = inlined_call_operand.hbm [shape: f32[2,8,32], index: 1, kind: input, shape index: {}]
  %s2 = inlined_call_operand.vmem [shape: bf16[8,16], index: 2, kind: input, shape index: {}]
  %s3 = inlined_call_operand.vmem [shape: f32[1,16], index: 3, kind: input, shape index: {}]
  %s4 = inlined_call_operand.hbm [shape: bf16[16,32], index: 4, kind: input, shape index: {}]
  %s5 = inlined_call_operand.vmem [shape: f32[1,32], index: 5, kind: input, shape index: {}]
  %s6 = inlined_call_operand.vmem [shape: bf16[32,32], index: 6, kind: input, shape index: {}]
  %s7 = inlined_call_operand.vmem [shape: f32[1,32], index: 7, kind: input, shape index: {}]
  %s8 = inlined_call_operand.hbm [shape: f32[2,8,32], index: 8, kind: output, shape index: {}]
  %s9 = sld [smem:[#allocation0]]
  $region77: #{tpu_custom_call.1} parent=0
    _
  %s11 = ssub.s32 1, %s9
  %s12 = scalar_select 0, %s11, %s9
  $region1: #{tpu_custom_call.1} parent=0
    #allocation2 [shape = 'u8[8192]{0}', space=vmem, size = 0x2000, scoped, tag = 'input window, operand 0']
    #allocation3 [shape = 's32[2]{0}', space=sflag, size = 0x8, scoped, tag = 'scoped memory for tpu_custom_call.1']
    #allocation4 [shape = 's32[2]{0}', space=sflag, size = 0x8, scoped, tag = 'scoped memory for tpu_custom_call.1']
    #allocation5 [shape = 'u8[8192]{0}', space=vmem, size = 0x2000, scoped, tag = 'input window, operand 1']
    #allocation6 [shape = 's32[2]{0}', space=sflag, size = 0x8, scoped, tag = 'scoped memory for tpu_custom_call.1']
    #allocation7 [shape = 'u8[4096]{0}', space=vmem, size = 0x1000, scoped, tag = 'input window, operand 4, single buffered']
    #allocation8 [shape = 'u8[8192]{0}', space=vmem, size = 0x2000, scoped, tag = 'output window, operand 0']
    %13 = vsyncpa [#allocation3], 0
    %s14 = scalar_lea.sflag [#allocation3], 1
    %15 = vsyncpa %s14, 0
    %16 = vsyncpa [#allocation6], 0
    %s17 = scalar_lea.sflag [#allocation6], 1
    %18 = vsyncpa %s17, 0
    %19 = vsyncpa [#allocation4], 0
    %s20 = scalar_lea.sflag [#allocation4], 1
    %21 = vsyncpa %s20, 0
    loop: start=0, step=1, limit=4
    $region2: #{tpu_custom_call.1} parent=1 // loop_pre_header
      _
    $region3: #{tpu_custom_call.1} parent=1 // loop_header
      %s23 = sphi 0, %s27
      %p24 = scmp.ge.s32.totalorder %s23, 4
      %s33 = sphi 0, %s35
      %s36 = sphi 0, %s33
      %s37 = sphi 0, %s36
      %s53 = sphi 0, %s37
      %s59 = sphi 0, %s61
      %s62 = sphi 0, %s59
      %s63 = sphi 0, %s62
      %s79 = sphi 0, %s63
      %s83 = sphi 0, %s83
      %s85 = sphi 0, %s83
      %s86 = sphi 0, %s85
      %s100 = sphi 0, %s86
      %s104 = sphi 0, %s104
      %s106 = sphi 0, %s104
      %s107 = sphi 0, %s106
      %s121 = sphi 0, %s107
      %s125 = sphi 0, %s125
      %s127 = sphi 0, %s125
      %s128 = sphi 0, %s127
      %s142 = sphi 0, %s128
      %s146 = sphi 0, %s146
      %s148 = sphi 0, %s146
      %s149 = sphi 0, %s148
      %s163 = sphi 0, %s149
      %s167 = sphi 0, %s167
      %s169 = sphi 0, %s167
      %s170 = sphi 0, %s169
      %s184 = sphi 0, %s170
      %s188 = sphi 0, %s188
      %s190 = sphi 0, %s188
      %s191 = sphi 0, %s190
      %s205 = sphi 0, %s191
      %s211 = sphi 0, %s213
      %s214 = sphi 0, %s211
      %s215 = sphi 0, %s214
      %s231 = sphi 0, %s215
    $region4: #{tpu_custom_call.1} parent=1 // loop_header_branch
      %26 = sbr.rel (%p24) target = $region8
    $region5: #{tpu_custom_call.1} parent=1 // loop_body
      %s28 = ssub.s32 %s23, 1
      %s29 = ssub.s32 %s23, 2
      %s30 = sadd.s32 %s23, 1
      %s31 = ssub.s32 %s23, %s30
      %p32 = scmp.eq.s32.totalorder %s31, 0
      %s34 = sadd.s32 %s33, 1
      %s35 = scalar_select %p32, %s33, %s34
      %p38 = pneg %p32
      %p39 = scmp.eq.s32.totalorder %s23, 1
      %p40 = por %p38, %p39
      %p41 = scmp.ne.s32.totalorder %s33, %s36
      %p42 = scmp.eq.s32.totalorder %s23, 0
      %p43 = por %p41, %p42
      %p44 = scmp.ne.s32.totalorder %s33, %s36
      %p45 = scmp.eq.s32.totalorder %s28, 1
      %p46 = por %p44, %p45
      %p47 = scmp.ne.s32.totalorder %s36, %s37
      %p48 = scmp.eq.s32.totalorder %s28, 0
      %p49 = por %p47, %p48
      %p50 = scmp.ne.s32.totalorder %s36, %s37
      %p51 = scmp.eq.s32.totalorder %s29, 1
      %p52 = por %p50, %p51
      %p54 = scmp.ne.s32.totalorder %s37, %s53
      %p55 = scmp.eq.s32.totalorder %s29, 0
      %p56 = por %p54, %p55
      %s57 = ssub.s32 %s23, %s30
      %p58 = scmp.eq.s32.totalorder %s57, 0
      %s60 = sadd.s32 %s59, 1
      %s61 = scalar_select %p58, %s59, %s60
      %p64 = pneg %p58
      %p65 = scmp.eq.s32.totalorder %s23, 1
      %p66 = por %p64, %p65
      %p67 = scmp.ne.s32.totalorder %s59, %s62
      %p68 = scmp.eq.s32.totalorder %s23, 0
      %p69 = por %p67, %p68
      %p70 = scmp.ne.s32.totalorder %s59, %s62
      %p71 = scmp.eq.s32.totalorder %s28, 1
      %p72 = por %p70, %p71
      %p73 = scmp.ne.s32.totalorder %s62, %s63
      %p74 = scmp.eq.s32.totalorder %s28, 0
      %p75 = por %p73, %p74
      %p76 = scmp.ne.s32.totalorder %s62, %s63
      %p77 = scmp.eq.s32.totalorder %s29, 1
      %p78 = por %p76, %p77
      %p80 = scmp.ne.s32.totalorder %s63, %s79
      %p81 = scmp.eq.s32.totalorder %s29, 0
      %p82 = por %p80, %p81
      %s84 = sadd.s32 %s83, 1
      %p87 = scmp.eq.s32.totalorder %s23, 1
      %p88 = scmp.ne.s32.totalorder %s83, %s85
      %p89 = scmp.eq.s32.totalorder %s23, 0
      %p90 = por %p88, %p89
      %p91 = scmp.ne.s32.totalorder %s83, %s85
      %p92 = scmp.eq.s32.totalorder %s28, 1
      %p93 = por %p91, %p92
      %p94 = scmp.ne.s32.totalorder %s85, %s86
      %p95 = scmp.eq.s32.totalorder %s28, 0
      %p96 = por %p94, %p95
      %p97 = scmp.ne.s32.totalorder %s85, %s86
      %p98 = scmp.eq.s32.totalorder %s29, 1
      %p99 = por %p97, %p98
      %p101 = scmp.ne.s32.totalorder %s86, %s100
      %p102 = scmp.eq.s32.totalorder %s29, 0
      %p103 = por %p101, %p102
      %s105 = sadd.s32 %s104, 1
      %p108 = scmp.eq.s32.totalorder %s23, 1
      %p109 = scmp.ne.s32.totalorder %s104, %s106
      %p110 = scmp.eq.s32.totalorder %s23, 0
      %p111 = por %p109, %p110
      %p112 = scmp.ne.s32.totalorder %s104, %s106
      %p113 = scmp.eq.s32.totalorder %s28, 1
      %p114 = por %p112, %p113
      %p115 = scmp.ne.s32.totalorder %s106, %s107
      %p116 = scmp.eq.s32.totalorder %s28, 0
      %p117 = por %p115, %p116
      %p118 = scmp.ne.s32.totalorder %s106, %s107
      %p119 = scmp.eq.s32.totalorder %s29, 1
      %p120 = por %p118, %p119
      %p122 = scmp.ne.s32.totalorder %s107, %s121
      %p123 = scmp.eq.s32.totalorder %s29, 0
      %p124 = por %p122, %p123
      %s126 = sadd.s32 %s125, 1
      %p129 = scmp.eq.s32.totalorder %s23, 1
      %p130 = scmp.ne.s32.totalorder %s125, %s127
      %p131 = scmp.eq.s32.totalorder %s23, 0
      %p132 = por %p130, %p131
      %p133 = scmp.ne.s32.totalorder %s125, %s127
      %p134 = scmp.eq.s32.totalorder %s28, 1
      %p135 = por %p133, %p134
      %p136 = scmp.ne.s32.totalorder %s127, %s128
      %p137 = scmp.eq.s32.totalorder %s28, 0
      %p138 = por %p136, %p137
      %p139 = scmp.ne.s32.totalorder %s127, %s128
      %p140 = scmp.eq.s32.totalorder %s29, 1
      %p141 = por %p139, %p140
      %p143 = scmp.ne.s32.totalorder %s128, %s142
      %p144 = scmp.eq.s32.totalorder %s29, 0
      %p145 = por %p143, %p144
      %s147 = sadd.s32 %s146, 1
      %p150 = scmp.eq.s32.totalorder %s23, 1
      %p151 = scmp.ne.s32.totalorder %s146, %s148
      %p152 = scmp.eq.s32.totalorder %s23, 0
      %p153 = por %p151, %p152
      %p154 = scmp.ne.s32.totalorder %s146, %s148
      %p155 = scmp.eq.s32.totalorder %s28, 1
      %p156 = por %p154, %p155
      %p157 = scmp.ne.s32.totalorder %s148, %s149
      %p158 = scmp.eq.s32.totalorder %s28, 0
      %p159 = por %p157, %p158
      %p160 = scmp.ne.s32.totalorder %s148, %s149
      %p161 = scmp.eq.s32.totalorder %s29, 1
      %p162 = por %p160, %p161
      %p164 = scmp.ne.s32.totalorder %s149, %s163
      %p165 = scmp.eq.s32.totalorder %s29, 0
      %p166 = por %p164, %p165
      %s168 = sadd.s32 %s167, 1
      %p171 = scmp.eq.s32.totalorder %s23, 1
      %p172 = scmp.ne.s32.totalorder %s167, %s169
      %p173 = scmp.eq.s32.totalorder %s23, 0
      %p174 = por %p172, %p173
      %p175 = scmp.ne.s32.totalorder %s167, %s169
      %p176 = scmp.eq.s32.totalorder %s28, 1
      %p177 = por %p175, %p176
      %p178 = scmp.ne.s32.totalorder %s169, %s170
      %p179 = scmp.eq.s32.totalorder %s28, 0
      %p180 = por %p178, %p179
      %p181 = scmp.ne.s32.totalorder %s169, %s170
      %p182 = scmp.eq.s32.totalorder %s29, 1
      %p183 = por %p181, %p182
      %p185 = scmp.ne.s32.totalorder %s170, %s184
      %p186 = scmp.eq.s32.totalorder %s29, 0
      %p187 = por %p185, %p186
      %s189 = sadd.s32 %s188, 1
      %p192 = scmp.eq.s32.totalorder %s23, 1
      %p193 = scmp.ne.s32.totalorder %s188, %s190
      %p194 = scmp.eq.s32.totalorder %s23, 0
      %p195 = por %p193, %p194
      %p196 = scmp.ne.s32.totalorder %s188, %s190
      %p197 = scmp.eq.s32.totalorder %s28, 1
      %p198 = por %p196, %p197
      %p199 = scmp.ne.s32.totalorder %s190, %s191
      %p200 = scmp.eq.s32.totalorder %s28, 0
      %p201 = por %p199, %p200
      %p202 = scmp.ne.s32.totalorder %s190, %s191
      %p203 = scmp.eq.s32.totalorder %s29, 1
      %p204 = por %p202, %p203
      %p206 = scmp.ne.s32.totalorder %s191, %s205
      %p207 = scmp.eq.s32.totalorder %s29, 0
      %p208 = por %p206, %p207
      %s209 = ssub.s32 %s23, %s30
      %p210 = scmp.eq.s32.totalorder %s209, 0
      %s212 = sadd.s32 %s211, 1
      %s213 = scalar_select %p210, %s211, %s212
      %p216 = pneg %p210
      %p217 = scmp.eq.s32.totalorder %s23, 1
      %p218 = por %p216, %p217
      %p219 = scmp.ne.s32.totalorder %s211, %s214
      %p220 = scmp.eq.s32.totalorder %s23, 0
      %p221 = por %p219, %p220
      %p222 = scmp.ne.s32.totalorder %s211, %s214
      %p223 = scmp.eq.s32.totalorder %s28, 1
      %p224 = por %p222, %p223
      %p225 = scmp.ne.s32.totalorder %s214, %s215
      %p226 = scmp.eq.s32.totalorder %s28, 0
      %p227 = por %p225, %p226
      %p228 = scmp.ne.s32.totalorder %s214, %s215
      %p229 = scmp.eq.s32.totalorder %s29, 1
      %p230 = por %p228, %p229
      %p232 = scmp.ne.s32.totalorder %s215, %s231
      %p233 = scmp.eq.s32.totalorder %s29, 0
      %p234 = por %p232, %p233
      %p235 = scmp.le.s32.totalorder 1, %s23
      %p236 = scmp.lt.s32.totalorder %s23, 3
      %p237 = pnand %p235, %p236
      %p238 = pneg %p237
      // Predicated region
      $region9: #{tpu_custom_call.1} parent=5 // pred_check
        _
      $region10: #{tpu_custom_call.1} parent=5 // pred_check_branch
        %240 = sbr.rel (%p237) target = $region12
      $region11: #{tpu_custom_call.1} parent=5 // pred_region
        %s241 = ssub.s32 %s23, 1
        // Predicated region
        $region13: #{tpu_custom_call.1} parent=11 // pred_check
          %p242 = pneg %p96
        $region14: #{tpu_custom_call.1} parent=11 // pred_check_branch
          %244 = sbr.rel (%p242) target = $region16
        $region15: #{tpu_custom_call.1} parent=11 // pred_region
          _
        $region16: #{tpu_custom_call.1} parent=11 // pred_fallthru
          _
        // Predicated region
        $region17: #{tpu_custom_call.1} parent=11 // pred_check
          %p245 = pneg %p117
        $region18: #{tpu_custom_call.1} parent=11 // pred_check_branch
          %247 = sbr.rel (%p245) target = $region20
        $region19: #{tpu_custom_call.1} parent=11 // pred_region
          _
        $region20: #{tpu_custom_call.1} parent=11 // pred_fallthru
          _
        // Predicated region
        $region21: #{tpu_custom_call.1} parent=11 // pred_check
          %p248 = pneg %p138
        $region22: #{tpu_custom_call.1} parent=11 // pred_check_branch
          %250 = sbr.rel (%p248) target = $region24
        $region23: #{tpu_custom_call.1} parent=11 // pred_region
          %s252 = ssub.s32 128, 128
          %253 = vsyncadd [#allocation6], %s252
          %s254 = sshll.u32 [#allocation7], 4
          %s255 = int_to_ptr.vmem [resolvable:$true] %s254
          %260 = dma.hbm_to_vmem [thread:$0]  %s4, 128, %s255, [#allocation6], 64, 64, 4
        $region24: #{tpu_custom_call.1} parent=11 // pred_fallthru
          _
        // Predicated region
        $region25: #{tpu_custom_call.1} parent=11 // pred_check
          %p261 = pneg %p159
        $region26: #{tpu_custom_call.1} parent=11 // pred_check_branch
          %263 = sbr.rel (%p261) target = $region28
        $region27: #{tpu_custom_call.1} parent=11 // pred_region
          _
        $region28: #{tpu_custom_call.1} parent=11 // pred_fallthru
          _
        // Predicated region
        $region29: #{tpu_custom_call.1} parent=11 // pred_check
          %p264 = pneg %p180
        $region30: #{tpu_custom_call.1} parent=11 // pred_check_branch
          %266 = sbr.rel (%p264) target = $region32
        $region31: #{tpu_custom_call.1} parent=11 // pred_region
          _
        $region32: #{tpu_custom_call.1} parent=11 // pred_fallthru
          _
        // Predicated region
        $region33: #{tpu_custom_call.1} parent=11 // pred_check
          %p267 = pneg %p201
        $region34: #{tpu_custom_call.1} parent=11 // pred_check_branch
          %269 = sbr.rel (%p267) target = $region36
        $region35: #{tpu_custom_call.1} parent=11 // pred_region
          _
        $region36: #{tpu_custom_call.1} parent=11 // pred_fallthru
          _
      $region12: #{tpu_custom_call.1} parent=5 // pred_fallthru
        _
      %p270 = scmp.lt.s32.totalorder %s23, 2
      // Predicated region
      $region37: #{tpu_custom_call.1} parent=5 // pred_check
        %p271 = pneg %p270
      $region38: #{tpu_custom_call.1} parent=5 // pred_check_branch
        %273 = sbr.rel (%p271) target = $region40
      $region39: #{tpu_custom_call.1} parent=5 // pred_region
        // Predicated region
        $region41: #{tpu_custom_call.1} parent=39 // pred_check
          %p274 = pneg %p43
        $region42: #{tpu_custom_call.1} parent=39 // pred_check_branch
          %276 = sbr.rel (%p274) target = $region44
        $region43: #{tpu_custom_call.1} parent=39 // pred_region
          %s277 = sand.u32 %s33, 1
          %s278 = scalar_lea.sflag [#allocation3], %s277
          %s279 = sand.u32 %s33, 1
          %s280 = smul.addr %s279, 8
          %s281 = scalar_lea.vmem [#allocation2], %s280
          %s283 = ssub.s32 128, 128
          %284 = vsyncadd %s278, %s283
          %s285 = smul.addr %s23, 128
          %s286 = scalar_lea.hbm %s0, %s285
          %s288 = sshll.u32 %s281, 4
          %s289 = int_to_ptr.vmem [resolvable:$true] %s288
          %291 = dma.hbm_to_vmem [thread:$0]  %s286, 128, %s289, %s278
        $region44: #{tpu_custom_call.1} parent=39 // pred_fallthru
          _
        // Predicated region
        $region45: #{tpu_custom_call.1} parent=39 // pred_check
          %p292 = pneg %p69
        $region46: #{tpu_custom_call.1} parent=39 // pred_check_branch
          %294 = sbr.rel (%p292) target = $region48
        $region47: #{tpu_custom_call.1} parent=39 // pred_region
          %s295 = sand.u32 %s23, 1
          %s296 = scalar_lea.sflag [#allocation6], %s295
          %s297 = sand.u32 %s59, 1
          %s298 = smul.addr %s297, 8
          %s299 = scalar_lea.vmem [#allocation5], %s298
          %s301 = ssub.s32 128, 128
          %302 = vsyncadd %s296, %s301
          %s303 = smul.addr %s23, 128
          %s304 = scalar_lea.hbm %s1, %s303
          %s306 = sshll.u32 %s299, 4
          %s307 = int_to_ptr.vmem [resolvable:$true] %s306
          %309 = dma.hbm_to_vmem [thread:$0]  %s304, 128, %s307, %s296
        $region48: #{tpu_custom_call.1} parent=39 // pred_fallthru
          _
      $region40: #{tpu_custom_call.1} parent=5 // pred_fallthru
        _
      %p310 = scmp.le.s32.totalorder 1, %s23
      %p311 = scmp.lt.s32.totalorder %s23, 3
      %p312 = pnand %p310, %p311
      %p313 = pneg %p312
      // Predicated region
      $region49: #{tpu_custom_call.1} parent=5 // pred_check
        _
      $region50: #{tpu_custom_call.1} parent=5 // pred_check_branch
        %315 = sbr.rel (%p312) target = $region52
      $region51: #{tpu_custom_call.1} parent=5 // pred_region
        %s316 = ssub.s32 %s23, 1
        %s317 = sand.u32 %s36, 1
        %s318 = scalar_lea.sflag [#allocation3], %s317
        %s319 = sand.u32 %s36, 1
        %s320 = smul.addr %s319, 8
        %s321 = scalar_lea.vmem [#allocation2], %s320
        // Predicated region
        $region53: #{tpu_custom_call.1} parent=51 // pred_check
          %p322 = pneg %p49
        $region54: #{tpu_custom_call.1} parent=51 // pred_check_branch
          %324 = sbr.rel (%p322) target = $region56
        $region55: #{tpu_custom_call.1} parent=51 // pred_region
          %325 = dma.done %s318, 128
        $region56: #{tpu_custom_call.1} parent=51 // pred_fallthru
          _
        %s326 = sand.u32 %s28, 1
        %s327 = scalar_lea.sflag [#allocation6], %s326
        %s328 = sand.u32 %s62, 1
        %s329 = smul.addr %s328, 8
        %s330 = scalar_lea.vmem [#allocation5], %s329
        // Predicated region
        $region57: #{tpu_custom_call.1} parent=51 // pred_check
          %p331 = pneg %p75
        $region58: #{tpu_custom_call.1} parent=51 // pred_check_branch
          %333 = sbr.rel (%p331) target = $region60
        $region59: #{tpu_custom_call.1} parent=51 // pred_region
          %334 = dma.done %s327, 128
        $region60: #{tpu_custom_call.1} parent=51 // pred_fallthru
          _
        // Predicated region
        $region61: #{tpu_custom_call.1} parent=51 // pred_check
          %p335 = pneg %p138
        $region62: #{tpu_custom_call.1} parent=51 // pred_check_branch
          %337 = sbr.rel (%p335) target = $region64
        $region63: #{tpu_custom_call.1} parent=51 // pred_region
          %338 = dma.done [#allocation6], 128
        $region64: #{tpu_custom_call.1} parent=51 // pred_fallthru
          _
        %s339 = sand.u32 %s36, 1
        %s340 = scalar_lea.sflag [#allocation3], %s339
        %s341 = sand.u32 %s36, 1
        %s342 = smul.addr %s341, 8
        %s343 = scalar_lea.vmem [#allocation2], %s342
        %p344 = pneg %p49
        %p345 = pneg %p46
        %s346 = sand.u32 %s28, 1
        %s347 = scalar_lea.sflag [#allocation6], %s346
        %s348 = sand.u32 %s62, 1
        %s349 = smul.addr %s348, 8
        %s350 = scalar_lea.vmem [#allocation5], %s349
        %p351 = pneg %p75
        %p352 = pneg %p72
        %p353 = pneg %p96
        %p354 = pneg %p93
        %p355 = pneg %p117
        %p356 = pneg %p114
        %p357 = pneg %p138
        %p358 = pneg %p135
        %p359 = pneg %p159
        %p360 = pneg %p156
        %p361 = pneg %p180
        %p362 = pneg %p177
        %p363 = pneg %p201
        %p364 = pneg %p198
        %p365 = pneg %p227
        %p366 = pneg %p224
        %s367 = sand.u32 %s214, 1
        %s368 = scalar_lea.sflag [#allocation4], %s367
        %s369 = sand.u32 %s214, 1
        %s370 = smul.addr %s369, 8
        %s371 = scalar_lea.vmem [#allocation8], %s370
        %v373 = vld [vmem:[%s321] sm:$0xff]
        %v374 = vld [vmem:[%s2] sm:$0xf]
        %v375 = vld [vmem:[%s3] sm:$0x1]
        %v376 = vpack.c.bf16 %v373, %v373
        %v378 = vlaneseq
        %v379 = vshrl.u32 %v378, 7
        %v380 = vsub.s32 0, %v379
        %v381 = vrot.slane %v375, %v380
        %vm383 = vcmask 64512
        %v385 = vsel %vm383, %v376, 0
        %vm387 = vcmask 1043456
        %v389 = vsel %vm387, %v374, 0
        %391 = vmatprep.subr.bf16.mxu0 0
        %392 = vmatpush1.bf16.msra.mxu0 %v389
        %393 = vmatprep.subr.bf16.mxu0 0
        %394 = vmatpush1.bf16.msra.mxu0 0
        %395 = vmatprep.subr.bf16.mxu0 0
        %396 = vmatpush1.bf16.msra.mxu0 0
        %397 = vmatprep.subr.bf16.mxu0 0
        %398 = vmatpush1.bf16.msra.mxu0 0
        %399 = vmatprep.subr.bf16.mxu0 0
        %400 = vmatpush1.bf16.msra.mxu0 0
        %401 = vmatprep.subr.bf16.mxu0 0
        %402 = vmatpush1.bf16.msra.mxu0 0
        %403 = vmatprep.subr.bf16.mxu0 0
        %404 = vmatpush1.bf16.msra.mxu0 0
        %405 = vmatprep.subr.bf16.mxu0 0
        %406 = vmatpush1.bf16.msra.mxu0 0
        %407 = vmatprep.subr.bf16.mxu0 0
        %408 = vmatpush1.bf16.msra.mxu0 0
        %409 = vmatprep.subr.bf16.mxu0 0
        %410 = vmatpush1.bf16.msra.mxu0 0
        %411 = vmatprep.subr.bf16.mxu0 0
        %412 = vmatpush1.bf16.msra.mxu0 0
        %413 = vmatprep.subr.bf16.mxu0 0
        %414 = vmatpush1.bf16.msra.mxu0 0
        %415 = vmatprep.subr.bf16.mxu0 0
        %416 = vmatpush1.bf16.msra.mxu0 0
        %417 = vmatprep.subr.bf16.mxu0 0
        %418 = vmatpush1.bf16.msra.mxu0 0
        %419 = vmatprep.subr.bf16.mxu0 0
        %420 = vmatpush1.bf16.msra.mxu0 0
        %421 = vmatprep.subr.bf16.mxu0 0
        %422 = vmatpush1.bf16.msra.mxu0 0
        %423 = vmatprep.mubr.bf16.mxu0 0
        %424 = vmatmul.mubr.bf16.gmra.mrb[0].mxu0 %v385
        %v425 = vpop.f32.mrb[0].mxu0
        %v426 = vadd.f32 %v381, %v425
        %v427 = vpop.f32.mrb[0].mxu0
        %v428 = vpop.f32.mrb[0].mxu0
        %v429 = vpop.f32.mrb[0].mxu0
        %430 = vdwg.mxu0
        %v431 = vmax.f32 %v426, 0.0
        %v432 = vld [vmem:[#allocation7] sm:$0xf]
        %v433 = vld [vmem:[#allocation7 + $0x4] sm:$0xf]
        %v434 = vld [vmem:[%s5] sm:$0x1]
        %v435 = vpack.c.bf16 %v431, %v431
        %v437 = vlaneseq
        %v438 = vshrl.u32 %v437, 7
        %v439 = vsub.s32 0, %v438
        %v440 = vrot.slane %v434, %v439
        %v444 = vunpack.c.l.b16 %v432
        %v445 = vunpack.c.l.b16 %v433
        %v446 = vpack.c.b16 %v445, %v444
        %vm448 = vcmask 130048
        %v450 = vsel %vm448, %v435, 0
        %452 = vmatprep.subr.bf16.mxu0 0
        %453 = vmatpush1.bf16.msra.mxu0 %v446
        %454 = vmatprep.subr.bf16.mxu0 0
        %455 = vmatpush1.bf16.msra.mxu0 0
        %456 = vmatprep.subr.bf16.mxu0 0
        %457 = vmatpush1.bf16.msra.mxu0 0
        %458 = vmatprep.subr.bf16.mxu0 0
        %459 = vmatpush1.bf16.msra.mxu0 0
        %460 = vmatprep.subr.bf16.mxu0 0
        %461 = vmatpush1.bf16.msra.mxu0 0
        %462 = vmatprep.subr.bf16.mxu0 0
        %463 = vmatpush1.bf16.msra.mxu0 0
        %464 = vmatprep.subr.bf16.mxu0 0
        %465 = vmatpush1.bf16.msra.mxu0 0
        %466 = vmatprep.subr.bf16.mxu0 0
        %467 = vmatpush1.bf16.msra.mxu0 0
        %468 = vmatprep.subr.bf16.mxu0 0
        %469 = vmatpush1.bf16.msra.mxu0 0
        %470 = vmatprep.subr.bf16.mxu0 0
        %471 = vmatpush1.bf16.msra.mxu0 0
        %472 = vmatprep.subr.bf16.mxu0 0
        %473 = vmatpush1.bf16.msra.mxu0 0
        %474 = vmatprep.subr.bf16.mxu0 0
        %475 = vmatpush1.bf16.msra.mxu0 0
        %476 = vmatprep.subr.bf16.mxu0 0
        %477 = vmatpush1.bf16.msra.mxu0 0
        %478 = vmatprep.subr.bf16.mxu0 0
        %479 = vmatpush1.bf16.msra.mxu0 0
        %480 = vmatprep.subr.bf16.mxu0 0
        %481 = vmatpush1.bf16.msra.mxu0 0
        %482 = vmatprep.subr.bf16.mxu0 0
        %483 = vmatpush1.bf16.msra.mxu0 0
        %484 = vmatprep.mubr.bf16.mxu0 0
        %485 = vmatmul.mubr.bf16.gmra.mrb[0].mxu0 %v450
        %v486 = vpop.f32.mrb[0].mxu0
        %v487 = vadd.f32 %v440, %v486
        %v488 = vpop.f32.mrb[0].mxu0
        %v489 = vpop.f32.mrb[0].mxu0
        %v490 = vpop.f32.mrb[0].mxu0
        %491 = vdwg.mxu0
        %v492 = vmax.f32 %v487, 0.0
        %v493 = vld [vmem:[%s6] sm:$0xf]
        %v494 = vld [vmem:[%s6 + $0x4] sm:$0xf]
        %v495 = vld [vmem:[%s6 + $0x8] sm:$0xf]
        %v496 = vld [vmem:[%s6 + $0xc] sm:$0xf]
        %v497 = vld [vmem:[%s7] sm:$0x1]
        %v498 = vpack.c.bf16 %v492, %v492
        %v500 = vlaneseq
        %v501 = vshrl.u32 %v500, 7
        %v502 = vsub.s32 0, %v501
        %v503 = vrot.slane %v497, %v502
        %v509 = vunpack.c.l.b16 %v493
        %v510 = vunpack.c.l.b16 %v494
        %v511 = vunpack.c.l.b16 %v495
        %v512 = vunpack.c.l.b16 %v496
        %v513 = vpack.c.b16 %v510, %v509
        %v514 = vpack.c.b16 %v512, %v511
        %vm517 = vcmask 261120
        %v519 = vsel %vm517, %v498, 0
        %521 = vmatprep.subr.bf16.mxu0 0
        %522 = vmatpush1.bf16.msra.mxu0 %v513
        %523 = vmatprep.subr.bf16.mxu0 0
        %524 = vmatpush1.bf16.msra.mxu0 %v514
        %525 = vmatprep.subr.bf16.mxu0 0
        %526 = vmatpush1.bf16.msra.mxu0 0
        %527 = vmatprep.subr.bf16.mxu0 0
        %528 = vmatpush1.bf16.msra.mxu0 0
        %529 = vmatprep.subr.bf16.mxu0 0
        %530 = vmatpush1.bf16.msra.mxu0 0
        %531 = vmatprep.subr.bf16.mxu0 0
        %532 = vmatpush1.bf16.msra.mxu0 0
        %533 = vmatprep.subr.bf16.mxu0 0
        %534 = vmatpush1.bf16.msra.mxu0 0
        %535 = vmatprep.subr.bf16.mxu0 0
        %536 = vmatpush1.bf16.msra.mxu0 0
        %537 = vmatprep.subr.bf16.mxu0 0
        %538 = vmatpush1.bf16.msra.mxu0 0
        %539 = vmatprep.subr.bf16.mxu0 0
        %540 = vmatpush1.bf16.msra.mxu0 0
        %541 = vmatprep.subr.bf16.mxu0 0
        %542 = vmatpush1.bf16.msra.mxu0 0
        %543 = vmatprep.subr.bf16.mxu0 0
        %544 = vmatpush1.bf16.msra.mxu0 0
        %545 = vmatprep.subr.bf16.mxu0 0
        %546 = vmatpush1.bf16.msra.mxu0 0
        %547 = vmatprep.subr.bf16.mxu0 0
        %548 = vmatpush1.bf16.msra.mxu0 0
        %549 = vmatprep.subr.bf16.mxu0 0
        %550 = vmatpush1.bf16.msra.mxu0 0
        %551 = vmatprep.subr.bf16.mxu0 0
        %552 = vmatpush1.bf16.msra.mxu0 0
        %553 = vmatprep.mubr.bf16.mxu0 0
        %554 = vmatmul.mubr.bf16.gmra.mrb[0].mxu0 %v519
        %v555 = vpop.f32.mrb[0].mxu0
        %v556 = vadd.f32 %v503, %v555
        %v557 = vpop.f32.mrb[0].mxu0
        %v558 = vpop.f32.mrb[0].mxu0
        %v559 = vpop.f32.mrb[0].mxu0
        %560 = vdwg.mxu0
        %v561 = vld [vmem:[%s330] sm:$0xff]
        %v562 = vadd.f32 %v561, %v556
        %563 = vst.msk [vmem:[%s371] sm:$0xff] %vm517, %v562
        %s564 = sand.u32 %s214, 1
        %s565 = scalar_lea.sflag [#allocation4], %s564
        %s566 = sand.u32 %s214, 1
        %s567 = smul.addr %s566, 8
        %s568 = scalar_lea.vmem [#allocation8], %s567
        // Predicated region
        $region65: #{tpu_custom_call.1} parent=51 // pred_check
          %p569 = pneg %p224
        $region66: #{tpu_custom_call.1} parent=51 // pred_check_branch
          %571 = sbr.rel (%p569) target = $region68
        $region67: #{tpu_custom_call.1} parent=51 // pred_region
          %s573 = ssub.s32 128, 128
          %574 = vsyncadd %s565, %s573
          %s575 = smul.addr %s28, 128
          %s576 = scalar_lea.hbm %s8, %s575
          %s578 = sshll.u32 %s568, 4
          %s579 = int_to_ptr.vmem [resolvable:$true] %s578
          %581 = dma.vmem_to_hbm [thread:$0]  %s579, 128, %s576, %s565
        $region68: #{tpu_custom_call.1} parent=51 // pred_fallthru
          _
      $region52: #{tpu_custom_call.1} parent=5 // pred_fallthru
        _
      %p582 = scmp.le.s32.totalorder 2, %s23
      // Predicated region
      $region69: #{tpu_custom_call.1} parent=5 // pred_check
        %p583 = pneg %p582
      $region70: #{tpu_custom_call.1} parent=5 // pred_check_branch
        %585 = sbr.rel (%p583) target = $region72
      $region71: #{tpu_custom_call.1} parent=5 // pred_region
        %s586 = ssub.s32 %s23, 2
        // Predicated region
        $region73: #{tpu_custom_call.1} parent=71 // pred_check
          %p587 = pneg %p230
        $region74: #{tpu_custom_call.1} parent=71 // pred_check_branch
          %589 = sbr.rel (%p587) target = $region76
        $region75: #{tpu_custom_call.1} parent=71 // pred_region
          %s590 = sand.u32 %s215, 1
          %s591 = scalar_lea.sflag [#allocation4], %s590
          %s592 = sand.u32 %s215, 1
          %s593 = smul.addr %s592, 8
          %s594 = scalar_lea.vmem [#allocation8], %s593
          %595 = dma.done %s591, 128
        $region76: #{tpu_custom_call.1} parent=71 // pred_fallthru
          _
      $region72: #{tpu_custom_call.1} parent=5 // pred_fallthru
        _
    $region6: #{tpu_custom_call.1} parent=1 // loop_footer
      %s27 = sadd.s32 1, %s23
    $region7: #{tpu_custom_call.1} parent=1 // loop_footer_branch
      %22 = sbr.rel target = $region3
    $region8: #{tpu_custom_call.1} parent=1 // loop_exit
      _
    %596 = vsyncpa [#allocation3], 1
    %s597 = scalar_lea.sflag [#allocation3], 1
    %598 = vsyncpa %s597, 1
    %599 = vsyncpa [#allocation6], 1
    %s600 = scalar_lea.sflag [#allocation6], 1
    %601 = vsyncpa %s600, 1
    %602 = vsyncpa [#allocation4], 1
    %s603 = scalar_lea.sflag [#allocation4], 1
    %604 = vsyncpa %s603, 1

</llo_original>
